<compile_context>
chip_gen: v5e
topology: v5e:2x2
jax: 0.10.0
libtpu: 0.0.40
codegen_flags: <defaults>
</compile_context>

<pallas_src>
import functools

import jax
import jax.numpy as jnp
import numpy as np
from jax.experimental import pallas as pl
from jax.experimental.pallas import tpu as pltpu

# ----------------------------- model config ---------------------------------
N_INPUT = 4
N_OUTPUT = 2
N_HIDDEN = 32
N_LAYERS = 3        # fcs (in->hidden) + (N_LAYERS-1) hidden->hidden + fce (hidden->out)
# TODO(synk): N_LAYERS == 1 (empty fch in the torch module) would drop the wh/bh
# operands entirely; this script assumes N_LAYERS >= 2.
assert N_LAYERS >= 2

BATCH = 256         # example batch

OUT_PAD = 128       # lane padding of the FINAL WEIGHT only (keeps the last matmul
                    # 128-lane aligned); the HBM output itself is UNPADDED.


# ------------------------- TPU-generation detection --------------------------
def _detect_tpu():
    """Return (is_v7x, has_bf16_vpu).

    v6e/v7x have bf16 VPU/EUP (cheap bf16 tanh); v5e does not.
    v7x is the only generation here with 2 TensorCores per chip."""
    kind = ""
    try:
        kind = jax.devices()[0].device_kind.lower()
    except Exception:
        pass
    is_v7x = "7" in kind                       # e.g. "tpu7x"
    has_bf16_vpu = is_v7x or ("v6" in kind)    # v5e (and older) -> f32 tanh path
    return is_v7x, has_bf16_vpu


IS_V7X, USE_BF16_TANH = _detect_tpu()
NUM_BATCH_TILES = 2 if IS_V7X else 1  # v5e/v6e: 1 TC -> grid=(1,); v7x: feed both TCs


# ------------------------------ Pallas kernel --------------------------------
def fcn_kernel(x_ref, w0_ref, b0_ref, wh_ref, bh_ref, we_ref, be_ref, o_ref,
               *, use_bf16_tanh):
    # x_ref:  (BT, N_INPUT)                    f32   (unpadded input features)
    # w0_ref: (N_INPUT, N_HIDDEN)              f32
    # b0_ref: (1, N_HIDDEN)                    f32
    # wh_ref: (N_LAYERS-1, N_HIDDEN, N_HIDDEN) bf16
    # bh_ref: (N_LAYERS-1, 1, N_HIDDEN)        f32
    # we_ref: (N_HIDDEN, OUT_PAD)              bf16  (output lanes zero-padded)
    # be_ref: (1, OUT_PAD)                     f32
    # o_ref:  (BT, N_OUTPUT)                   f32   (UNPADDED output block)
    x = x_ref[...]
    w0 = w0_ref[...]

    # ---- layer 0 on the VPU: N_INPUT broadcast FMAs (K=4; an MXU pass over a
    #      mostly-padded contraction is not worth it).  f32 throughout. ---------
    acc = b0_ref[...]                           # (1, N_HIDDEN) -> broadcasts over batch
    for k in range(w0.shape[0]):                # static tiny loop (N_INPUT)
        acc = acc + x[:, k:k + 1] * w0[k:k + 1, :]

    def act(z):
        # bf16 tanh on v6e/v7x (bf16 VPU/EUP); f32 tanh on v5e.  The next matmul
        # consumes bf16 either way, so no extra cast pass is emitted.
        return jnp.tanh(z.astype(jnp.bfloat16)) if use_bf16_tanh else jnp.tanh(z)

    h = act(acc)                                # (BT, N_HIDDEN)

    # ---- hidden->hidden layers on the MXU: bf16 operands, f32 accumulation ----
    for layer in range(wh_ref.shape[0]):        # static (N_LAYERS - 1)
        z = jnp.dot(h.astype(jnp.bfloat16), wh_ref[layer],
                    preferred_element_type=jnp.float32) + bh_ref[layer]
        h = act(z)

    # ---- final linear: 128-lane-aligned matmul, but store ONLY the first
    #      N_OUTPUT columns into the unpadded output block (review item #1) -----
    out = jnp.dot(h.astype(jnp.bfloat16), we_ref[...],
                  preferred_element_type=jnp.float32) + be_ref[...]
    o_ref[...] = out[:, :N_OUTPUT].astype(o_ref.dtype)


# ------------------------------- wrapper --------------------------------------
def prepare_params(w0, b0, wh, bh, we, be):
    """One-time packing of parameters into the exact kernel layout (done OUTSIDE
    the jitted forward so no pad/cast ops sit on the per-call critical path)."""
    w0_k = w0.astype(jnp.float32)                                   # (N_INPUT, N_HIDDEN)
    b0_k = b0.reshape(1, N_HIDDEN).astype(jnp.float32)              # (1, N_HIDDEN)
    wh_k = wh.astype(jnp.bfloat16)                                  # (L-1, H, H)
    bh_k = bh.reshape(N_LAYERS - 1, 1, N_HIDDEN).astype(jnp.float32)
    we_k = (jnp.zeros((N_HIDDEN, OUT_PAD), jnp.bfloat16)
            .at[:, :N_OUTPUT].set(we.astype(jnp.bfloat16)))         # (H, OUT_PAD)
    be_k = jnp.zeros((1, OUT_PAD), jnp.float32).at[:, :N_OUTPUT].set(be[None, :])
    return w0_k, b0_k, wh_k, bh_k, we_k, be_k


@jax.jit
def fcn_forward(x, w0_k, b0_k, wh_k, bh_k, we_k, be_k):
    """x: (batch, N_INPUT) f32 -> (batch, N_OUTPUT) f32.  Params pre-packed."""
    batch = x.shape[0]

    # Generation-aware batch tiling (perf review):
    #   v5e/v6e (1 TC): one grid step  -> no per-step pipeline overhead.
    #   v7x   (2 TCs): two "parallel" grid steps -> both cores get work.
    # A split tile must keep the sublane dim divisible by 8; a full-batch single
    # tile is always legal (block dim == full array dim).
    if NUM_BATCH_TILES > 1 and batch % (NUM_BATCH_TILES * 8) == 0:
        num_tiles = NUM_BATCH_TILES
    else:
        num_tiles = 1
    bt = batch // num_tiles

    kernel = functools.partial(fcn_kernel, use_bf16_tanh=USE_BF16_TANH)

    return pl.pallas_call(
        kernel,
        out_shape=jax.ShapeDtypeStruct((batch, N_OUTPUT), jnp.float32),
        grid_spec=pltpu.PrefetchScalarGridSpec(
            num_scalar_prefetch=0,
            grid=(num_tiles,),
            in_specs=[
                # x: batch axis tiled; last dim == full array dim (N_INPUT)
                pl.BlockSpec((bt, N_INPUT), lambda i: (i, 0)),
                # grid-invariant parameter blocks (constant index_map => fetched once)
                pl.BlockSpec((N_INPUT, N_HIDDEN), lambda i: (0, 0)),
                pl.BlockSpec((1, N_HIDDEN), lambda i: (0, 0)),
                pl.BlockSpec((N_LAYERS - 1, N_HIDDEN, N_HIDDEN), lambda i: (0, 0, 0)),
                pl.BlockSpec((N_LAYERS - 1, 1, N_HIDDEN), lambda i: (0, 0, 0)),
                pl.BlockSpec((N_HIDDEN, OUT_PAD), lambda i: (0, 0)),
                pl.BlockSpec((1, OUT_PAD), lambda i: (0, 0)),
            ],
            # UNPADDED output: last dim N_OUTPUT == full array dim (satisfies the
            # (8,128) rule); total writeback is just batch*N_OUTPUT*4 bytes.
            out_specs=pl.BlockSpec((bt, N_OUTPUT), lambda i: (i, 0)),
        ),
        compiler_params=pltpu.CompilerParams(
            dimension_semantics=("parallel",),   # batch tiles shard across v7x TCs
        ),
    )(x, w0_k, b0_k, wh_k, bh_k, we_k, be_k)


# ---------------------- deterministic parameter init --------------------------
def _linear_init(key, fan_in, fan_out):
    """Mimic torch.nn.Linear default init: U(-1/sqrt(fan_in), 1/sqrt(fan_in)).
    Weight returned in (fan_in, fan_out) layout (already transposed for x @ W)."""
    kw, kb = jax.random.split(key)
    bound = 1.0 / np.sqrt(fan_in)
    w = jax.random.uniform(kw, (fan_in, fan_out), jnp.float32, -bound, bound)
    b = jax.random.uniform(kb, (fan_out,), jnp.float32, -bound, bound)
    return w, b


def init_params(key):
    keys = jax.random.split(key, N_LAYERS + 1)
    w0, b0 = _linear_init(keys[0], N_INPUT, N_HIDDEN)
    wh_list, bh_list = [], []
    for layer in range(N_LAYERS - 1):
        w, b = _linear_init(keys[1 + layer], N_HIDDEN, N_HIDDEN)
        wh_list.append(w)
        bh_list.append(b)
    wh = jnp.stack(wh_list, axis=0)  # (N_LAYERS-1, N_HIDDEN, N_HIDDEN)
    bh = jnp.stack(bh_list, axis=0)  # (N_LAYERS-1, N_HIDDEN)
    we, be = _linear_init(keys[N_LAYERS], N_HIDDEN, N_OUTPUT)
    return w0, b0, wh, bh, we, be


# ------------------------------- references -----------------------------------
def reference_forward_f32(x, w0, b0, wh, bh, we, be):
    """Exact PyTorch-FCN semantics in pure f32."""
    h = jnp.tanh(x @ w0 + b0)
    for layer in range(wh.shape[0]):
        h = jnp.tanh(h @ wh[layer] + bh[layer])
    return h @ we + be


def reference_forward_mixed(x, w0, b0, wh, bh, we, be, use_bf16_tanh):
    """Pure-JAX reference mirroring the kernel's numeric recipe exactly
    (f32 VPU layer 0, bf16 MXU operands, f32 accumulation, generation-chosen
    tanh precision)."""
    def act(z):
        return jnp.tanh(z.astype(jnp.bfloat16)) if use_bf16_tanh else jnp.tanh(z)

    h = b0[None, :]
    for k in range(w0.shape[0]):
        h = h + x[:, k:k + 1] * w0[k:k + 1, :]
    h = act(h)
    for layer in range(wh.shape[0]):
        z = jnp.dot(h.astype(jnp.bfloat16), wh[layer].astype(jnp.bfloat16),
                    preferred_element_type=jnp.float32) + bh[layer]
        h = act(z)
    return jnp.dot(h.astype(jnp.bfloat16), we.astype(jnp.bfloat16),
                   preferred_element_type=jnp.float32) + be


if __name__ == "__main__":
    key = jax.random.PRNGKey(0)
    k_params, k_x = jax.random.split(key)

    params = init_params(k_params)                 # torch-semantics f32 params
    kparams = prepare_params(*params)              # one-time kernel-layout packing
    x = jax.random.normal(k_x, (BATCH, N_INPUT), jnp.float32)

    out = fcn_forward(x, *kparams)
    out = jax.block_until_ready(out)
    assert out.shape == (BATCH, N_OUTPUT)

    # Tight check against a reference using the same mixed-precision recipe.
    ref_mix = reference_forward_mixed(x, *params, use_bf16_tanh=USE_BF16_TANH)
    np.testing.assert_allclose(np.asarray(out), np.asarray(ref_mix),
                               rtol=1e-2, atol=1e-2)

    # Sanity check against the exact f32 PyTorch semantics; tolerance reflects the
    # intentional bf16 weight/activation storage (f32 accumulation keeps the error
    # at the ~1e-3 level for this tanh MLP).
    ref_f32 = reference_forward_f32(x, *params)
    np.testing.assert_allclose(np.asarray(out), np.asarray(ref_f32),
                               rtol=2e-2, atol=2e-2)

    print("KERNEL_OK")
</pallas_src>

<mosaic_0001>
module attributes {stable_mosaic.version = 11 : i64} {
  func.func @fcn_kernel(%arg0: i32, %arg1: memref<256x4xf32, #tpu.memory_space<vmem>>, %arg2: memref<4x32xf32, #tpu.memory_space<vmem>>, %arg3: memref<1x32xf32, #tpu.memory_space<vmem>>, %arg4: memref<2x32x32xbf16, #tpu.memory_space<vmem>>, %arg5: memref<2x1x32xf32, #tpu.memory_space<vmem>>, %arg6: memref<32x128xbf16, #tpu.memory_space<vmem>>, %arg7: memref<1x128xf32, #tpu.memory_space<vmem>>, %arg8: memref<256x2xf32, #tpu.memory_space<vmem>>) attributes {dimension_semantics = [#tpu.dimension_semantics<parallel>], iteration_bounds = array<i64: 1>, scalar_prefetch = 0 : i64, scratch_operands = 0 : i64, tpu.core_type = #tpu.core_type<tc>, window_params = [{transform_indices = @transform_0, window_bounds = array<i64: 256, 4>}, {pipeline_mode = #tpu.pipeline_mode<synchronous>, transform_indices = @transform_1, window_bounds = array<i64: 4, 32>}, {pipeline_mode = #tpu.pipeline_mode<synchronous>, transform_indices = @transform_2, window_bounds = array<i64: 1, 32>}, {pipeline_mode = #tpu.pipeline_mode<synchronous>, transform_indices = @transform_3, window_bounds = array<i64: 2, 32, 32>}, {pipeline_mode = #tpu.pipeline_mode<synchronous>, transform_indices = @transform_4, window_bounds = array<i64: 2, 1, 32>}, {pipeline_mode = #tpu.pipeline_mode<synchronous>, transform_indices = @transform_5, window_bounds = array<i64: 32, 128>}, {pipeline_mode = #tpu.pipeline_mode<synchronous>, transform_indices = @transform_6, window_bounds = array<i64: 1, 128>}, {transform_indices = @transform_7, window_bounds = array<i64: 256, 2>}]} {
    %c0 = arith.constant 0 : index
    %c0_0 = arith.constant 0 : index
    %0 = vector.load %arg1[%c0, %c0_0] : memref<256x4xf32, #tpu.memory_space<vmem>>, vector<256x4xf32>
    %c0_1 = arith.constant 0 : index
    %c0_2 = arith.constant 0 : index
    %1 = vector.load %arg2[%c0_1, %c0_2] : memref<4x32xf32, #tpu.memory_space<vmem>>, vector<4x32xf32>
    %c0_3 = arith.constant 0 : index
    %c0_4 = arith.constant 0 : index
    %2 = vector.load %arg3[%c0_3, %c0_4] : memref<1x32xf32, #tpu.memory_space<vmem>>, vector<1x32xf32>
    %3 = vector.extract_strided_slice %0 {offsets = [0, 0], sizes = [256, 1], strides = [1, 1]} : vector<256x4xf32> to vector<256x1xf32>
    %4 = vector.extract_strided_slice %1 {offsets = [0, 0], sizes = [1, 32], strides = [1, 1]} : vector<4x32xf32> to vector<1x32xf32>
    %5 = vector.broadcast %3 : vector<256x1xf32> to vector<256x32xf32>
    %6 = vector.broadcast %4 : vector<1x32xf32> to vector<256x32xf32>
    %7 = arith.mulf %5, %6 : vector<256x32xf32>
    %8 = vector.broadcast %2 : vector<1x32xf32> to vector<256x32xf32>
    %9 = arith.addf %8, %7 : vector<256x32xf32>
    %10 = vector.extract_strided_slice %0 {offsets = [0, 1], sizes = [256, 1], strides = [1, 1]} : vector<256x4xf32> to vector<256x1xf32>
    %11 = vector.extract_strided_slice %1 {offsets = [1, 0], sizes = [1, 32], strides = [1, 1]} : vector<4x32xf32> to vector<1x32xf32>
    %12 = vector.broadcast %10 : vector<256x1xf32> to vector<256x32xf32>
    %13 = vector.broadcast %11 : vector<1x32xf32> to vector<256x32xf32>
    %14 = arith.mulf %12, %13 : vector<256x32xf32>
    %15 = arith.addf %9, %14 : vector<256x32xf32>
    %16 = vector.extract_strided_slice %0 {offsets = [0, 2], sizes = [256, 1], strides = [1, 1]} : vector<256x4xf32> to vector<256x1xf32>
    %17 = vector.extract_strided_slice %1 {offsets = [2, 0], sizes = [1, 32], strides = [1, 1]} : vector<4x32xf32> to vector<1x32xf32>
    %18 = vector.broadcast %16 : vector<256x1xf32> to vector<256x32xf32>
    %19 = vector.broadcast %17 : vector<1x32xf32> to vector<256x32xf32>
    %20 = arith.mulf %18, %19 : vector<256x32xf32>
    %21 = arith.addf %15, %20 : vector<256x32xf32>
    %22 = vector.extract_strided_slice %0 {offsets = [0, 3], sizes = [256, 1], strides = [1, 1]} : vector<256x4xf32> to vector<256x1xf32>
    %23 = vector.extract_strided_slice %1 {offsets = [3, 0], sizes = [1, 32], strides = [1, 1]} : vector<4x32xf32> to vector<1x32xf32>
    %24 = vector.broadcast %22 : vector<256x1xf32> to vector<256x32xf32>
    %25 = vector.broadcast %23 : vector<1x32xf32> to vector<256x32xf32>
    %26 = arith.mulf %24, %25 : vector<256x32xf32>
    %27 = arith.addf %21, %26 : vector<256x32xf32>
    %28 = math.tanh %27 : vector<256x32xf32>
    %29 = arith.truncf %28 : vector<256x32xf32> to vector<256x32xbf16>
    %c0_5 = arith.constant 0 : index
    %c0_6 = arith.constant 0 : index
    %c0_7 = arith.constant 0 : index
    %30 = vector.load %arg4[%c0_5, %c0_6, %c0_7] : memref<2x32x32xbf16, #tpu.memory_space<vmem>>, vector<1x32x32xbf16>
    %31 = vector.shape_cast %30 : vector<1x32x32xbf16> to vector<32x32xbf16>
    %cst = arith.constant dense<0.000000e+00> : vector<256x32xf32>
    %32 = tpu.matmul %29, %31, %cst {dimension_numbers = #tpu.dot_dimension_numbers<[1], [0], [0], [1], [0, 0, 1, 1], [], []>} : vector<256x32xbf16>, vector<32x32xbf16>, vector<256x32xf32> -> vector<256x32xf32>
    %c0_8 = arith.constant 0 : index
    %c0_9 = arith.constant 0 : index
    %c0_10 = arith.constant 0 : index
    %33 = vector.load %arg5[%c0_8, %c0_9, %c0_10] : memref<2x1x32xf32, #tpu.memory_space<vmem>>, vector<1x1x32xf32>
    %34 = vector.shape_cast %33 : vector<1x1x32xf32> to vector<1x32xf32>
    %35 = vector.broadcast %34 : vector<1x32xf32> to vector<256x32xf32>
    %36 = arith.addf %32, %35 : vector<256x32xf32>
    %37 = math.tanh %36 : vector<256x32xf32>
    %38 = arith.truncf %37 : vector<256x32xf32> to vector<256x32xbf16>
    %c1 = arith.constant 1 : index
    %c0_11 = arith.constant 0 : index
    %c0_12 = arith.constant 0 : index
    %39 = vector.load %arg4[%c1, %c0_11, %c0_12] : memref<2x32x32xbf16, #tpu.memory_space<vmem>>, vector<1x32x32xbf16>
    %40 = vector.shape_cast %39 : vector<1x32x32xbf16> to vector<32x32xbf16>
    %cst_13 = arith.constant dense<0.000000e+00> : vector<256x32xf32>
    %41 = tpu.matmul %38, %40, %cst_13 {dimension_numbers = #tpu.dot_dimension_numbers<[1], [0], [0], [1], [0, 0, 1, 1], [], []>} : vector<256x32xbf16>, vector<32x32xbf16>, vector<256x32xf32> -> vector<256x32xf32>
    %c1_14 = arith.constant 1 : index
    %c0_15 = arith.constant 0 : index
    %c0_16 = arith.constant 0 : index
    %42 = vector.load %arg5[%c1_14, %c0_15, %c0_16] : memref<2x1x32xf32, #tpu.memory_space<vmem>>, vector<1x1x32xf32>
    %43 = vector.shape_cast %42 : vector<1x1x32xf32> to vector<1x32xf32>
    %44 = vector.broadcast %43 : vector<1x32xf32> to vector<256x32xf32>
    %45 = arith.addf %41, %44 : vector<256x32xf32>
    %46 = math.tanh %45 : vector<256x32xf32>
    %47 = arith.truncf %46 : vector<256x32xf32> to vector<256x32xbf16>
    %c0_17 = arith.constant 0 : index
    %c0_18 = arith.constant 0 : index
    %48 = vector.load %arg6[%c0_17, %c0_18] : memref<32x128xbf16, #tpu.memory_space<vmem>>, vector<32x128xbf16>
    %cst_19 = arith.constant dense<0.000000e+00> : vector<256x128xf32>
    %49 = tpu.matmul %47, %48, %cst_19 {dimension_numbers = #tpu.dot_dimension_numbers<[1], [0], [0], [1], [0, 0, 1, 1], [], []>} : vector<256x32xbf16>, vector<32x128xbf16>, vector<256x128xf32> -> vector<256x128xf32>
    %c0_20 = arith.constant 0 : index
    %c0_21 = arith.constant 0 : index
    %50 = vector.load %arg7[%c0_20, %c0_21] : memref<1x128xf32, #tpu.memory_space<vmem>>, vector<1x128xf32>
    %51 = vector.broadcast %50 : vector<1x128xf32> to vector<256x128xf32>
    %52 = arith.addf %49, %51 : vector<256x128xf32>
    %53 = vector.extract_strided_slice %52 {offsets = [0, 0], sizes = [256, 2], strides = [1, 1]} : vector<256x128xf32> to vector<256x2xf32>
    %c0_22 = arith.constant 0 : index
    %c0_23 = arith.constant 0 : index
    %54 = vector.load %arg8[%c0_22, %c0_23] : memref<256x2xf32, #tpu.memory_space<vmem>>, vector<256x2xf32>
    tpu.vector_store %arg8[%c0_22, %c0_23], %53 {strides = array<i32>} : memref<256x2xf32, #tpu.memory_space<vmem>>, vector<256x2xf32>,
    return
  }
  func.func @transform_0(%arg0: i32) -> (i32, i32) {
    %c0_i32 = arith.constant 0 : i32
    %c0_i32_0 = arith.constant 0 : i32
    return %arg0, %c0_i32 : i32, i32
  }
  func.func @transform_1(%arg0: i32) -> (i32, i32) {
    %c0_i32 = arith.constant 0 : i32
    %c0_i32_0 = arith.constant 0 : i32
    %c0_i32_1 = arith.constant 0 : i32
    return %c0_i32, %c0_i32_0 : i32, i32
  }
  func.func @transform_2(%arg0: i32) -> (i32, i32) {
    %c0_i32 = arith.constant 0 : i32
    %c0_i32_0 = arith.constant 0 : i32
    %c0_i32_1 = arith.constant 0 : i32
    return %c0_i32, %c0_i32_0 : i32, i32
  }
  func.func @transform_3(%arg0: i32) -> (i32, i32, i32) {
    %c0_i32 = arith.constant 0 : i32
    %c0_i32_0 = arith.constant 0 : i32
    %c0_i32_1 = arith.constant 0 : i32
    %c0_i32_2 = arith.constant 0 : i32
    return %c0_i32, %c0_i32_0, %c0_i32_1 : i32, i32, i32
  }
  func.func @transform_4(%arg0: i32) -> (i32, i32, i32) {
    %c0_i32 = arith.constant 0 : i32
    %c0_i32_0 = arith.constant 0 : i32
    %c0_i32_1 = arith.constant 0 : i32
    %c0_i32_2 = arith.constant 0 : i32
    return %c0_i32, %c0_i32_0, %c0_i32_1 : i32, i32, i32
  }
  func.func @transform_5(%arg0: i32) -> (i32, i32) {
    %c0_i32 = arith.constant 0 : i32
    %c0_i32_0 = arith.constant 0 : i32
    %c0_i32_1 = arith.constant 0 : i32
    return %c0_i32, %c0_i32_0 : i32, i32
  }
  func.func @transform_6(%arg0: i32) -> (i32, i32) {
    %c0_i32 = arith.constant 0 : i32
    %c0_i32_0 = arith.constant 0 : i32
    %c0_i32_1 = arith.constant 0 : i32
    return %c0_i32, %c0_i32_0 : i32, i32
  }
  func.func @transform_7(%arg0: i32) -> (i32, i32) {
    %c0_i32 = arith.constant 0 : i32
    %c0_i32_0 = arith.constant 0 : i32
    return %arg0, %c0_i32 : i32, i32
  }
}

</mosaic_0001>

<llo_original>
// kernel: fcn_forward.1
$region0: #{fcn_forward.1}
  #allocation0 [shape = 'u32[]', space=smem, size = 0x4, offset = 0x4, fixed_abs, tag = 'smem constant byte address 0x4 - core index']
  #allocation1 [shape = 'u32[72,128]{1,0:T(1,128)}', space=vmem, size = 0x9000, scoped, tag = 'internal scratch']
  %s0 = inlined_call_operand.vmem [shape: f32[256,4], index: 0, kind: input, shape index: {}]
  %s1 = inlined_call_operand.vmem [shape: f32[4,32], index: 1, kind: input, shape index: {}]
  %s2 = inlined_call_operand.vmem [shape: f32[1,32], index: 2, kind: input, shape index: {}]
  %s3 = inlined_call_operand.vmem [shape: bf16[2,32,32], index: 3, kind: input, shape index: {}]
  %s4 = inlined_call_operand.vmem [shape: f32[2,1,32], index: 4, kind: input, shape index: {}]
  %s5 = inlined_call_operand.vmem [shape: bf16[32,128], index: 5, kind: input, shape index: {}]
  %s6 = inlined_call_operand.vmem [shape: f32[1,128], index: 6, kind: input, shape index: {}]
  %s7 = inlined_call_operand.vmem [shape: f32[256,2], index: 7, kind: output, shape index: {}]
  %s8 = sld [smem:[#allocation0]]
  $region38: #{fcn_forward.1} parent=0
    _
  %s10 = ssub.s32 1, %s8
  %s11 = scalar_select 0, %s10, %s8
  // Predicated region
  $region2: #{fcn_forward.1} parent=0 // pred_check
    _
  $region3: #{fcn_forward.1} parent=0 // pred_check_branch
    %13 = sbr.rel (0) target = $region5
  $region4: #{fcn_forward.1} parent=0 // pred_region
    _
  $region5: #{fcn_forward.1} parent=0 // pred_fallthru
    _
  // Predicated region
  $region6: #{fcn_forward.1} parent=0 // pred_check
    _
  $region7: #{fcn_forward.1} parent=0 // pred_check_branch
    %15 = sbr.rel (0) target = $region9
  $region8: #{fcn_forward.1} parent=0 // pred_region
    _
  $region9: #{fcn_forward.1} parent=0 // pred_fallthru
    _
  // Predicated region
  $region10: #{fcn_forward.1} parent=0 // pred_check
    _
  $region11: #{fcn_forward.1} parent=0 // pred_check_branch
    %17 = sbr.rel (0) target = $region13
  $region12: #{fcn_forward.1} parent=0 // pred_region
    _
  $region13: #{fcn_forward.1} parent=0 // pred_fallthru
    _
  // Predicated region
  $region14: #{fcn_forward.1} parent=0 // pred_check
    _
  $region15: #{fcn_forward.1} parent=0 // pred_check_branch
    %19 = sbr.rel (0) target = $region17
  $region16: #{fcn_forward.1} parent=0 // pred_region
    _
  $region17: #{fcn_forward.1} parent=0 // pred_fallthru
    _
  // Predicated region
  $region18: #{fcn_forward.1} parent=0 // pred_check
    _
  $region19: #{fcn_forward.1} parent=0 // pred_check_branch
    %21 = sbr.rel (0) target = $region21
  $region20: #{fcn_forward.1} parent=0 // pred_region
    _
  $region21: #{fcn_forward.1} parent=0 // pred_fallthru
    _
  // Predicated region
  $region22: #{fcn_forward.1} parent=0 // pred_check
    _
  $region23: #{fcn_forward.1} parent=0 // pred_check_branch
    %23 = sbr.rel (0) target = $region25
  $region24: #{fcn_forward.1} parent=0 // pred_region
    _
  $region25: #{fcn_forward.1} parent=0 // pred_fallthru
    _
  // Predicated region
  $region26: #{fcn_forward.1} parent=0 // pred_check
    _
  $region27: #{fcn_forward.1} parent=0 // pred_check_branch
    %25 = sbr.rel (0) target = $region29
  $region28: #{fcn_forward.1} parent=0 // pred_region
    _
  $region29: #{fcn_forward.1} parent=0 // pred_fallthru
    _
  %v27 = vld [vmem:[%s0] sm:$0xff]
  %v28 = vld [vmem:[%s0 + $0x8] sm:$0xff]
  %v29 = vld [vmem:[%s0 + $0x10] sm:$0xff]
  %v30 = vld [vmem:[%s0 + $0x18] sm:$0xff]
  %v31 = vld [vmem:[%s0 + $0x20] sm:$0xff]
  %v32 = vld [vmem:[%s0 + $0x28] sm:$0xff]
  %v33 = vld [vmem:[%s0 + $0x30] sm:$0xff]
  %v34 = vld [vmem:[%s0 + $0x38] sm:$0xff]
  %v35 = vld [vmem:[%s0 + $0x40] sm:$0xff]
  %v36 = vld [vmem:[%s0 + $0x48] sm:$0xff]
  %v37 = vld [vmem:[%s0 + $0x50] sm:$0xff]
  %v38 = vld [vmem:[%s0 + $0x58] sm:$0xff]
  %v39 = vld [vmem:[%s0 + $0x60] sm:$0xff]
  %v40 = vld [vmem:[%s0 + $0x68] sm:$0xff]
  %v41 = vld [vmem:[%s0 + $0x70] sm:$0xff]
  %v42 = vld [vmem:[%s0 + $0x78] sm:$0xff]
  %v43 = vld [vmem:[%s0 + $0x80] sm:$0xff]
  %v44 = vld [vmem:[%s0 + $0x88] sm:$0xff]
  %v45 = vld [vmem:[%s0 + $0x90] sm:$0xff]
  %v46 = vld [vmem:[%s0 + $0x98] sm:$0xff]
  %v47 = vld [vmem:[%s0 + $0xa0] sm:$0xff]
  %v48 = vld [vmem:[%s0 + $0xa8] sm:$0xff]
  %v49 = vld [vmem:[%s0 + $0xb0] sm:$0xff]
  %v50 = vld [vmem:[%s0 + $0xb8] sm:$0xff]
  %v51 = vld [vmem:[%s0 + $0xc0] sm:$0xff]
  %v52 = vld [vmem:[%s0 + $0xc8] sm:$0xff]
  %v53 = vld [vmem:[%s0 + $0xd0] sm:$0xff]
  %v54 = vld [vmem:[%s0 + $0xd8] sm:$0xff]
  %v55 = vld [vmem:[%s0 + $0xe0] sm:$0xff]
  %v56 = vld [vmem:[%s0 + $0xe8] sm:$0xff]
  %v57 = vld [vmem:[%s0 + $0xf0] sm:$0xff]
  %v58 = vld [vmem:[%s0 + $0xf8] sm:$0xff]
  %v59 = vld [vmem:[%s1] sm:$0xf]
  %v60 = vld [vmem:[%s2] sm:$0x1]
  %62 = vset.pattern.permute.xlu0 0
  %63 = vperm.xlu0 %62, %v27
  %v64 = vpop.permute.xlu0 %63
  %67 = vset.pattern.permute.xlu0 0
  %68 = vperm.xlu0 %67, %v28
  %v69 = vpop.permute.xlu0 %68
  %72 = vset.pattern.permute.xlu0 0
  %73 = vperm.xlu0 %72, %v29
  %v74 = vpop.permute.xlu0 %73
  %77 = vset.pattern.permute.xlu0 0
  %78 = vperm.xlu0 %77, %v30
  %v79 = vpop.permute.xlu0 %78
  %82 = vset.pattern.permute.xlu0 0
  %83 = vperm.xlu0 %82, %v31
  %v84 = vpop.permute.xlu0 %83
  %87 = vset.pattern.permute.xlu0 0
  %88 = vperm.xlu0 %87, %v32
  %v89 = vpop.permute.xlu0 %88
  %92 = vset.pattern.permute.xlu0 0
  %93 = vperm.xlu0 %92, %v33
  %v94 = vpop.permute.xlu0 %93
  %97 = vset.pattern.permute.xlu0 0
  %98 = vperm.xlu0 %97, %v34
  %v99 = vpop.permute.xlu0 %98
  %102 = vset.pattern.permute.xlu0 0
  %103 = vperm.xlu0 %102, %v35
  %v104 = vpop.permute.xlu0 %103
  %107 = vset.pattern.permute.xlu0 0
  %108 = vperm.xlu0 %107, %v36
  %v109 = vpop.permute.xlu0 %108
  %112 = vset.pattern.permute.xlu0 0
  %113 = vperm.xlu0 %112, %v37
  %v114 = vpop.permute.xlu0 %113
  %117 = vset.pattern.permute.xlu0 0
  %118 = vperm.xlu0 %117, %v38
  %v119 = vpop.permute.xlu0 %118
  %122 = vset.pattern.permute.xlu0 0
  %123 = vperm.xlu0 %122, %v39
  %v124 = vpop.permute.xlu0 %123
  %127 = vset.pattern.permute.xlu0 0
  %128 = vperm.xlu0 %127, %v40
  %v129 = vpop.permute.xlu0 %128
  %132 = vset.pattern.permute.xlu0 0
  %133 = vperm.xlu0 %132, %v41
  %v134 = vpop.permute.xlu0 %133
  %137 = vset.pattern.permute.xlu0 0
  %138 = vperm.xlu0 %137, %v42
  %v139 = vpop.permute.xlu0 %138
  %142 = vset.pattern.permute.xlu0 0
  %143 = vperm.xlu0 %142, %v43
  %v144 = vpop.permute.xlu0 %143
  %147 = vset.pattern.permute.xlu0 0
  %148 = vperm.xlu0 %147, %v44
  %v149 = vpop.permute.xlu0 %148
  %152 = vset.pattern.permute.xlu0 0
  %153 = vperm.xlu0 %152, %v45
  %v154 = vpop.permute.xlu0 %153
  %157 = vset.pattern.permute.xlu0 0
  %158 = vperm.xlu0 %157, %v46
  %v159 = vpop.permute.xlu0 %158
  %162 = vset.pattern.permute.xlu0 0
  %163 = vperm.xlu0 %162, %v47
  %v164 = vpop.permute.xlu0 %163
  %167 = vset.pattern.permute.xlu0 0
  %168 = vperm.xlu0 %167, %v48
  %v169 = vpop.permute.xlu0 %168
  %172 = vset.pattern.permute.xlu0 0
  %173 = vperm.xlu0 %172, %v49
  %v174 = vpop.permute.xlu0 %173
  %177 = vset.pattern.permute.xlu0 0
  %178 = vperm.xlu0 %177, %v50
  %v179 = vpop.permute.xlu0 %178
  %182 = vset.pattern.permute.xlu0 0
  %183 = vperm.xlu0 %182, %v51
  %v184 = vpop.permute.xlu0 %183
  %187 = vset.pattern.permute.xlu0 0
  %188 = vperm.xlu0 %187, %v52
  %v189 = vpop.permute.xlu0 %188
  %192 = vset.pattern.permute.xlu0 0
  %193 = vperm.xlu0 %192, %v53
  %v194 = vpop.permute.xlu0 %193
  %197 = vset.pattern.permute.xlu0 0
  %198 = vperm.xlu0 %197, %v54
  %v199 = vpop.permute.xlu0 %198
  %202 = vset.pattern.permute.xlu0 0
  %203 = vperm.xlu0 %202, %v55
  %v204 = vpop.permute.xlu0 %203
  %207 = vset.pattern.permute.xlu0 0
  %208 = vperm.xlu0 %207, %v56
  %v209 = vpop.permute.xlu0 %208
  %212 = vset.pattern.permute.xlu0 0
  %213 = vperm.xlu0 %212, %v57
  %v214 = vpop.permute.xlu0 %213
  %217 = vset.pattern.permute.xlu0 0
  %218 = vperm.xlu0 %217, %v58
  %v219 = vpop.permute.xlu0 %218
  %v221 = vperm.slane %v59, 0
  %v222 = vmul.f32 %v64, %v221
  %v223 = vmul.f32 %v69, %v221
  %v224 = vmul.f32 %v74, %v221
  %v225 = vmul.f32 %v79, %v221
  %v226 = vmul.f32 %v84, %v221
  %v227 = vmul.f32 %v89, %v221
  %v228 = vmul.f32 %v94, %v221
  %v229 = vmul.f32 %v99, %v221
  %v230 = vmul.f32 %v104, %v221
  %v231 = vmul.f32 %v109, %v221
  %v232 = vmul.f32 %v114, %v221
  %v233 = vmul.f32 %v119, %v221
  %v234 = vmul.f32 %v124, %v221
  %v235 = vmul.f32 %v129, %v221
  %v236 = vmul.f32 %v134, %v221
  %v237 = vmul.f32 %v139, %v221
  %v238 = vmul.f32 %v144, %v221
  %v239 = vmul.f32 %v149, %v221
  %v240 = vmul.f32 %v154, %v221
  %v241 = vmul.f32 %v159, %v221
  %v242 = vmul.f32 %v164, %v221
  %v243 = vmul.f32 %v169, %v221
  %v244 = vmul.f32 %v174, %v221
  %v245 = vmul.f32 %v179, %v221
  %v246 = vmul.f32 %v184, %v221
  %v247 = vmul.f32 %v189, %v221
  %v248 = vmul.f32 %v194, %v221
  %v249 = vmul.f32 %v199, %v221
  %v250 = vmul.f32 %v204, %v221
  %v251 = vmul.f32 %v209, %v221
  %v252 = vmul.f32 %v214, %v221
  %v253 = vmul.f32 %v219, %v221
  %v255 = vperm.slane %v60, 0
  %v257 = vadd.f32 %v255, %v222
  %v258 = vadd.f32 %v255, %v223
  %v259 = vadd.f32 %v255, %v224
  %v260 = vadd.f32 %v255, %v225
  %v261 = vadd.f32 %v255, %v226
  %v262 = vadd.f32 %v255, %v227
  %v263 = vadd.f32 %v255, %v228
  %v264 = vadd.f32 %v255, %v229
  %v265 = vadd.f32 %v255, %v230
  %v266 = vadd.f32 %v255, %v231
  %v267 = vadd.f32 %v255, %v232
  %v268 = vadd.f32 %v255, %v233
  %v269 = vadd.f32 %v255, %v234
  %v270 = vadd.f32 %v255, %v235
  %v271 = vadd.f32 %v255, %v236
  %v272 = vadd.f32 %v255, %v237
  %v273 = vadd.f32 %v255, %v238
  %v274 = vadd.f32 %v255, %v239
  %v275 = vadd.f32 %v255, %v240
  %v276 = vadd.f32 %v255, %v241
  %v277 = vadd.f32 %v255, %v242
  %v278 = vadd.f32 %v255, %v243
  %v279 = vadd.f32 %v255, %v244
  %v280 = vadd.f32 %v255, %v245
  %v281 = vadd.f32 %v255, %v246
  %v282 = vadd.f32 %v255, %v247
  %v283 = vadd.f32 %v255, %v248
  %v284 = vadd.f32 %v255, %v249
  %v285 = vadd.f32 %v255, %v250
  %v286 = vadd.f32 %v255, %v251
  %v287 = vadd.f32 %v255, %v252
  %v288 = vadd.f32 %v255, %v253
  %289 = vset.pattern.permute.xlu0 1
  %290 = vperm.xlu0 %289, %v27
  %v291 = vpop.permute.xlu0 %290
  %293 = vset.pattern.permute.xlu0 1
  %294 = vperm.xlu0 %293, %v28
  %v295 = vpop.permute.xlu0 %294
  %297 = vset.pattern.permute.xlu0 1
  %298 = vperm.xlu0 %297, %v29
  %v299 = vpop.permute.xlu0 %298
  %301 = vset.pattern.permute.xlu0 1
  %302 = vperm.xlu0 %301, %v30
  %v303 = vpop.permute.xlu0 %302
  %305 = vset.pattern.permute.xlu0 1
  %306 = vperm.xlu0 %305, %v31
  %v307 = vpop.permute.xlu0 %306
  %309 = vset.pattern.permute.xlu0 1
  %310 = vperm.xlu0 %309, %v32
  %v311 = vpop.permute.xlu0 %310
  %313 = vset.pattern.permute.xlu0 1
  %314 = vperm.xlu0 %313, %v33
  %v315 = vpop.permute.xlu0 %314
  %317 = vset.pattern.permute.xlu0 1
  %318 = vperm.xlu0 %317, %v34
  %v319 = vpop.permute.xlu0 %318
  %321 = vset.pattern.permute.xlu0 1
  %322 = vperm.xlu0 %321, %v35
  %v323 = vpop.permute.xlu0 %322
  %325 = vset.pattern.permute.xlu0 1
  %326 = vperm.xlu0 %325, %v36
  %v327 = vpop.permute.xlu0 %326
  %329 = vset.pattern.permute.xlu0 1
  %330 = vperm.xlu0 %329, %v37
  %v331 = vpop.permute.xlu0 %330
  %333 = vset.pattern.permute.xlu0 1
  %334 = vperm.xlu0 %333, %v38
  %v335 = vpop.permute.xlu0 %334
  %337 = vset.pattern.permute.xlu0 1
  %338 = vperm.xlu0 %337, %v39
  %v339 = vpop.permute.xlu0 %338
  %341 = vset.pattern.permute.xlu0 1
  %342 = vperm.xlu0 %341, %v40
  %v343 = vpop.permute.xlu0 %342
  %345 = vset.pattern.permute.xlu0 1
  %346 = vperm.xlu0 %345, %v41
  %v347 = vpop.permute.xlu0 %346
  %349 = vset.pattern.permute.xlu0 1
  %350 = vperm.xlu0 %349, %v42
  %v351 = vpop.permute.xlu0 %350
  %353 = vset.pattern.permute.xlu0 1
  %354 = vperm.xlu0 %353, %v43
  %v355 = vpop.permute.xlu0 %354
  %357 = vset.pattern.permute.xlu0 1
  %358 = vperm.xlu0 %357, %v44
  %v359 = vpop.permute.xlu0 %358
  %361 = vset.pattern.permute.xlu0 1
  %362 = vperm.xlu0 %361, %v45
  %v363 = vpop.permute.xlu0 %362
  %365 = vset.pattern.permute.xlu0 1
  %366 = vperm.xlu0 %365, %v46
  %v367 = vpop.permute.xlu0 %366
  %369 = vset.pattern.permute.xlu0 1
  %370 = vperm.xlu0 %369, %v47
  %v371 = vpop.permute.xlu0 %370
  %373 = vset.pattern.permute.xlu0 1
  %374 = vperm.xlu0 %373, %v48
  %v375 = vpop.permute.xlu0 %374
  %377 = vset.pattern.permute.xlu0 1
  %378 = vperm.xlu0 %377, %v49
  %v379 = vpop.permute.xlu0 %378
  %381 = vset.pattern.permute.xlu0 1
  %382 = vperm.xlu0 %381, %v50
  %v383 = vpop.permute.xlu0 %382
  %385 = vset.pattern.permute.xlu0 1
  %386 = vperm.xlu0 %385, %v51
  %v387 = vpop.permute.xlu0 %386
  %389 = vset.pattern.permute.xlu0 1
  %390 = vperm.xlu0 %389, %v52
  %v391 = vpop.permute.xlu0 %390
  %393 = vset.pattern.permute.xlu0 1
  %394 = vperm.xlu0 %393, %v53
  %v395 = vpop.permute.xlu0 %394
  %397 = vset.pattern.permute.xlu0 1
  %398 = vperm.xlu0 %397, %v54
  %v399 = vpop.permute.xlu0 %398
  %401 = vset.pattern.permute.xlu0 1
  %402 = vperm.xlu0 %401, %v55
  %v403 = vpop.permute.xlu0 %402
  %405 = vset.pattern.permute.xlu0 1
  %406 = vperm.xlu0 %405, %v56
  %v407 = vpop.permute.xlu0 %406
  %409 = vset.pattern.permute.xlu0 1
  %410 = vperm.xlu0 %409, %v57
  %v411 = vpop.permute.xlu0 %410
  %413 = vset.pattern.permute.xlu0 1
  %414 = vperm.xlu0 %413, %v58
  %v415 = vpop.permute.xlu0 %414
  %v417 = vperm.slane %v59, 1
  %v418 = vmul.f32 %v291, %v417
  %v419 = vmul.f32 %v295, %v417
  %v420 = vmul.f32 %v299, %v417
  %v421 = vmul.f32 %v303, %v417
  %v422 = vmul.f32 %v307, %v417
  %v423 = vmul.f32 %v311, %v417
  %v424 = vmul.f32 %v315, %v417
  %v425 = vmul.f32 %v319, %v417
  %v426 = vmul.f32 %v323, %v417
  %v427 = vmul.f32 %v327, %v417
  %v428 = vmul.f32 %v331, %v417
  %v429 = vmul.f32 %v335, %v417
  %v430 = vmul.f32 %v339, %v417
  %v431 = vmul.f32 %v343, %v417
  %v432 = vmul.f32 %v347, %v417
  %v433 = vmul.f32 %v351, %v417
  %v434 = vmul.f32 %v355, %v417
  %v435 = vmul.f32 %v359, %v417
  %v436 = vmul.f32 %v363, %v417
  %v437 = vmul.f32 %v367, %v417
  %v438 = vmul.f32 %v371, %v417
  %v439 = vmul.f32 %v375, %v417
  %v440 = vmul.f32 %v379, %v417
  %v441 = vmul.f32 %v383, %v417
  %v442 = vmul.f32 %v387, %v417
  %v443 = vmul.f32 %v391, %v417
  %v444 = vmul.f32 %v395, %v417
  %v445 = vmul.f32 %v399, %v417
  %v446 = vmul.f32 %v403, %v417
  %v447 = vmul.f32 %v407, %v417
  %v448 = vmul.f32 %v411, %v417
  %v449 = vmul.f32 %v415, %v417
  %v450 = vadd.f32 %v257, %v418
  %v451 = vadd.f32 %v258, %v419
  %v452 = vadd.f32 %v259, %v420
  %v453 = vadd.f32 %v260, %v421
  %v454 = vadd.f32 %v261, %v422
  %v455 = vadd.f32 %v262, %v423
  %v456 = vadd.f32 %v263, %v424
  %v457 = vadd.f32 %v264, %v425
  %v458 = vadd.f32 %v265, %v426
  %v459 = vadd.f32 %v266, %v427
  %v460 = vadd.f32 %v267, %v428
  %v461 = vadd.f32 %v268, %v429
  %v462 = vadd.f32 %v269, %v430
  %v463 = vadd.f32 %v270, %v431
  %v464 = vadd.f32 %v271, %v432
  %v465 = vadd.f32 %v272, %v433
  %v466 = vadd.f32 %v273, %v434
  %v467 = vadd.f32 %v274, %v435
  %v468 = vadd.f32 %v275, %v436
  %v469 = vadd.f32 %v276, %v437
  %v470 = vadd.f32 %v277, %v438
  %v471 = vadd.f32 %v278, %v439
  %v472 = vadd.f32 %v279, %v440
  %v473 = vadd.f32 %v280, %v441
  %v474 = vadd.f32 %v281, %v442
  %v475 = vadd.f32 %v282, %v443
  %v476 = vadd.f32 %v283, %v444
  %v477 = vadd.f32 %v284, %v445
  %v478 = vadd.f32 %v285, %v446
  %v479 = vadd.f32 %v286, %v447
  %v480 = vadd.f32 %v287, %v448
  %v481 = vadd.f32 %v288, %v449
  %482 = vset.pattern.permute.xlu0 2
  %483 = vperm.xlu0 %482, %v27
  %v484 = vpop.permute.xlu0 %483
  %486 = vset.pattern.permute.xlu0 2
  %487 = vperm.xlu0 %486, %v28
  %v488 = vpop.permute.xlu0 %487
  %490 = vset.pattern.permute.xlu0 2
  %491 = vperm.xlu0 %490, %v29
  %v492 = vpop.permute.xlu0 %491
  %494 = vset.pattern.permute.xlu0 2
  %495 = vperm.xlu0 %494, %v30
  %v496 = vpop.permute.xlu0 %495
  %498 = vset.pattern.permute.xlu0 2
  %499 = vperm.xlu0 %498, %v31
  %v500 = vpop.permute.xlu0 %499
  %502 = vset.pattern.permute.xlu0 2
  %503 = vperm.xlu0 %502, %v32
  %v504 = vpop.permute.xlu0 %503
  %506 = vset.pattern.permute.xlu0 2
  %507 = vperm.xlu0 %506, %v33
  %v508 = vpop.permute.xlu0 %507
  %510 = vset.pattern.permute.xlu0 2
  %511 = vperm.xlu0 %510, %v34
  %v512 = vpop.permute.xlu0 %511
  %514 = vset.pattern.permute.xlu0 2
  %515 = vperm.xlu0 %514, %v35
  %v516 = vpop.permute.xlu0 %515
  %518 = vset.pattern.permute.xlu0 2
  %519 = vperm.xlu0 %518, %v36
  %v520 = vpop.permute.xlu0 %519
  %522 = vset.pattern.permute.xlu0 2
  %523 = vperm.xlu0 %522, %v37
  %v524 = vpop.permute.xlu0 %523
  %526 = vset.pattern.permute.xlu0 2
  %527 = vperm.xlu0 %526, %v38
  %v528 = vpop.permute.xlu0 %527
  %530 = vset.pattern.permute.xlu0 2
  %531 = vperm.xlu0 %530, %v39
  %v532 = vpop.permute.xlu0 %531
  %534 = vset.pattern.permute.xlu0 2
  %535 = vperm.xlu0 %534, %v40
  %v536 = vpop.permute.xlu0 %535
  %538 = vset.pattern.permute.xlu0 2
  %539 = vperm.xlu0 %538, %v41
  %v540 = vpop.permute.xlu0 %539
  %542 = vset.pattern.permute.xlu0 2
  %543 = vperm.xlu0 %542, %v42
  %v544 = vpop.permute.xlu0 %543
  %546 = vset.pattern.permute.xlu0 2
  %547 = vperm.xlu0 %546, %v43
  %v548 = vpop.permute.xlu0 %547
  %550 = vset.pattern.permute.xlu0 2
  %551 = vperm.xlu0 %550, %v44
  %v552 = vpop.permute.xlu0 %551
  %554 = vset.pattern.permute.xlu0 2
  %555 = vperm.xlu0 %554, %v45
  %v556 = vpop.permute.xlu0 %555
  %558 = vset.pattern.permute.xlu0 2
  %559 = vperm.xlu0 %558, %v46
  %v560 = vpop.permute.xlu0 %559
  %562 = vset.pattern.permute.xlu0 2
  %563 = vperm.xlu0 %562, %v47
  %v564 = vpop.permute.xlu0 %563
  %566 = vset.pattern.permute.xlu0 2
  %567 = vperm.xlu0 %566, %v48
  %v568 = vpop.permute.xlu0 %567
  %570 = vset.pattern.permute.xlu0 2
  %571 = vperm.xlu0 %570, %v49
  %v572 = vpop.permute.xlu0 %571
  %574 = vset.pattern.permute.xlu0 2
  %575 = vperm.xlu0 %574, %v50
  %v576 = vpop.permute.xlu0 %575
  %578 = vset.pattern.permute.xlu0 2
  %579 = vperm.xlu0 %578, %v51
  %v580 = vpop.permute.xlu0 %579
  %582 = vset.pattern.permute.xlu0 2
  %583 = vperm.xlu0 %582, %v52
  %v584 = vpop.permute.xlu0 %583
  %586 = vset.pattern.permute.xlu0 2
  %587 = vperm.xlu0 %586, %v53
  %v588 = vpop.permute.xlu0 %587
  %590 = vset.pattern.permute.xlu0 2
  %591 = vperm.xlu0 %590, %v54
  %v592 = vpop.permute.xlu0 %591
  %594 = vset.pattern.permute.xlu0 2
  %595 = vperm.xlu0 %594, %v55
  %v596 = vpop.permute.xlu0 %595
  %598 = vset.pattern.permute.xlu0 2
  %599 = vperm.xlu0 %598, %v56
  %v600 = vpop.permute.xlu0 %599
  %602 = vset.pattern.permute.xlu0 2
  %603 = vperm.xlu0 %602, %v57
  %v604 = vpop.permute.xlu0 %603
  %606 = vset.pattern.permute.xlu0 2
  %607 = vperm.xlu0 %606, %v58
  %v608 = vpop.permute.xlu0 %607
  %v610 = vperm.slane %v59, 2
  %v611 = vmul.f32 %v484, %v610
  %v612 = vmul.f32 %v488, %v610
  %v613 = vmul.f32 %v492, %v610
  %v614 = vmul.f32 %v496, %v610
  %v615 = vmul.f32 %v500, %v610
  %v616 = vmul.f32 %v504, %v610
  %v617 = vmul.f32 %v508, %v610
  %v618 = vmul.f32 %v512, %v610
  %v619 = vmul.f32 %v516, %v610
  %v620 = vmul.f32 %v520, %v610
  %v621 = vmul.f32 %v524, %v610
  %v622 = vmul.f32 %v528, %v610
  %v623 = vmul.f32 %v532, %v610
  %v624 = vmul.f32 %v536, %v610
  %v625 = vmul.f32 %v540, %v610
  %v626 = vmul.f32 %v544, %v610
  %v627 = vmul.f32 %v548, %v610
  %v628 = vmul.f32 %v552, %v610
  %v629 = vmul.f32 %v556, %v610
  %v630 = vmul.f32 %v560, %v610
  %v631 = vmul.f32 %v564, %v610
  %v632 = vmul.f32 %v568, %v610
  %v633 = vmul.f32 %v572, %v610
  %v634 = vmul.f32 %v576, %v610
  %v635 = vmul.f32 %v580, %v610
  %v636 = vmul.f32 %v584, %v610
  %v637 = vmul.f32 %v588, %v610
  %v638 = vmul.f32 %v592, %v610
  %v639 = vmul.f32 %v596, %v610
  %v640 = vmul.f32 %v600, %v610
  %v641 = vmul.f32 %v604, %v610
  %v642 = vmul.f32 %v608, %v610
  %v643 = vadd.f32 %v450, %v611
  %v644 = vadd.f32 %v451, %v612
  %v645 = vadd.f32 %v452, %v613
  %v646 = vadd.f32 %v453, %v614
  %v647 = vadd.f32 %v454, %v615
  %v648 = vadd.f32 %v455, %v616
  %v649 = vadd.f32 %v456, %v617
  %v650 = vadd.f32 %v457, %v618
  %v651 = vadd.f32 %v458, %v619
  %v652 = vadd.f32 %v459, %v620
  %v653 = vadd.f32 %v460, %v621
  %v654 = vadd.f32 %v461, %v622
  %v655 = vadd.f32 %v462, %v623
  %v656 = vadd.f32 %v463, %v624
  %v657 = vadd.f32 %v464, %v625
  %v658 = vadd.f32 %v465, %v626
  %v659 = vadd.f32 %v466, %v627
  %v660 = vadd.f32 %v467, %v628
  %v661 = vadd.f32 %v468, %v629
  %v662 = vadd.f32 %v469, %v630
  %v663 = vadd.f32 %v470, %v631
  %v664 = vadd.f32 %v471, %v632
  %v665 = vadd.f32 %v472, %v633
  %v666 = vadd.f32 %v473, %v634
  %v667 = vadd.f32 %v474, %v635
  %v668 = vadd.f32 %v475, %v636
  %v669 = vadd.f32 %v476, %v637
  %v670 = vadd.f32 %v477, %v638
  %v671 = vadd.f32 %v478, %v639
  %v672 = vadd.f32 %v479, %v640
  %v673 = vadd.f32 %v480, %v641
  %v674 = vadd.f32 %v481, %v642
  %675 = vset.pattern.permute.xlu0 3
  %676 = vperm.xlu0 %675, %v27
  %v677 = vpop.permute.xlu0 %676
  %679 = vset.pattern.permute.xlu0 3
  %680 = vperm.xlu0 %679, %v28
  %v681 = vpop.permute.xlu0 %680
  %683 = vset.pattern.permute.xlu0 3
  %684 = vperm.xlu0 %683, %v29
  %v685 = vpop.permute.xlu0 %684
  %687 = vset.pattern.permute.xlu0 3
  %688 = vperm.xlu0 %687, %v30
  %v689 = vpop.permute.xlu0 %688
  %691 = vset.pattern.permute.xlu0 3
  %692 = vperm.xlu0 %691, %v31
  %v693 = vpop.permute.xlu0 %692
  %695 = vset.pattern.permute.xlu0 3
  %696 = vperm.xlu0 %695, %v32
  %v697 = vpop.permute.xlu0 %696
  %699 = vset.pattern.permute.xlu0 3
  %700 = vperm.xlu0 %699, %v33
  %v701 = vpop.permute.xlu0 %700
  %703 = vset.pattern.permute.xlu0 3
  %704 = vperm.xlu0 %703, %v34
  %v705 = vpop.permute.xlu0 %704
  %707 = vset.pattern.permute.xlu0 3
  %708 = vperm.xlu0 %707, %v35
  %v709 = vpop.permute.xlu0 %708
  %711 = vset.pattern.permute.xlu0 3
  %712 = vperm.xlu0 %711, %v36
  %v713 = vpop.permute.xlu0 %712
  %715 = vset.pattern.permute.xlu0 3
  %716 = vperm.xlu0 %715, %v37
  %v717 = vpop.permute.xlu0 %716
  %719 = vset.pattern.permute.xlu0 3
  %720 = vperm.xlu0 %719, %v38
  %v721 = vpop.permute.xlu0 %720
  %723 = vset.pattern.permute.xlu0 3
  %724 = vperm.xlu0 %723, %v39
  %v725 = vpop.permute.xlu0 %724
  %727 = vset.pattern.permute.xlu0 3
  %728 = vperm.xlu0 %727, %v40
  %v729 = vpop.permute.xlu0 %728
  %731 = vset.pattern.permute.xlu0 3
  %732 = vperm.xlu0 %731, %v41
  %v733 = vpop.permute.xlu0 %732
  %735 = vset.pattern.permute.xlu0 3
  %736 = vperm.xlu0 %735, %v42
  %v737 = vpop.permute.xlu0 %736
  %739 = vset.pattern.permute.xlu0 3
  %740 = vperm.xlu0 %739, %v43
  %v741 = vpop.permute.xlu0 %740
  %743 = vset.pattern.permute.xlu0 3
  %744 = vperm.xlu0 %743, %v44
  %v745 = vpop.permute.xlu0 %744
  %747 = vset.pattern.permute.xlu0 3
  %748 = vperm.xlu0 %747, %v45
  %v749 = vpop.permute.xlu0 %748
  %751 = vset.pattern.permute.xlu0 3
  %752 = vperm.xlu0 %751, %v46
  %v753 = vpop.permute.xlu0 %752
  %755 = vset.pattern.permute.xlu0 3
  %756 = vperm.xlu0 %755, %v47
  %v757 = vpop.permute.xlu0 %756
  %759 = vset.pattern.permute.xlu0 3
  %760 = vperm.xlu0 %759, %v48
  %v761 = vpop.permute.xlu0 %760
  %763 = vset.pattern.permute.xlu0 3
  %764 = vperm.xlu0 %763, %v49
  %v765 = vpop.permute.xlu0 %764
  %767 = vset.pattern.permute.xlu0 3
  %768 = vperm.xlu0 %767, %v50
  %v769 = vpop.permute.xlu0 %768
  %771 = vset.pattern.permute.xlu0 3
  %772 = vperm.xlu0 %771, %v51
  %v773 = vpop.permute.xlu0 %772
  %775 = vset.pattern.permute.xlu0 3
  %776 = vperm.xlu0 %775, %v52
  %v777 = vpop.permute.xlu0 %776
  %779 = vset.pattern.permute.xlu0 3
  %780 = vperm.xlu0 %779, %v53
  %v781 = vpop.permute.xlu0 %780
  %783 = vset.pattern.permute.xlu0 3
  %784 = vperm.xlu0 %783, %v54
  %v785 = vpop.permute.xlu0 %784
  %787 = vset.pattern.permute.xlu0 3
  %788 = vperm.xlu0 %787, %v55
  %v789 = vpop.permute.xlu0 %788
  %791 = vset.pattern.permute.xlu0 3
  %792 = vperm.xlu0 %791, %v56
  %v793 = vpop.permute.xlu0 %792
  %795 = vset.pattern.permute.xlu0 3
  %796 = vperm.xlu0 %795, %v57
  %v797 = vpop.permute.xlu0 %796
  %799 = vset.pattern.permute.xlu0 3
  %800 = vperm.xlu0 %799, %v58
  %v801 = vpop.permute.xlu0 %800
  %v803 = vperm.slane %v59, 3
  %v804 = vmul.f32 %v677, %v803
  %v805 = vmul.f32 %v681, %v803
  %v806 = vmul.f32 %v685, %v803
  %v807 = vmul.f32 %v689, %v803
  %v808 = vmul.f32 %v693, %v803
  %v809 = vmul.f32 %v697, %v803
  %v810 = vmul.f32 %v701, %v803
  %v811 = vmul.f32 %v705, %v803
  %v812 = vmul.f32 %v709, %v803
  %v813 = vmul.f32 %v713, %v803
  %v814 = vmul.f32 %v717, %v803
  %v815 = vmul.f32 %v721, %v803
  %v816 = vmul.f32 %v725, %v803
  %v817 = vmul.f32 %v729, %v803
  %v818 = vmul.f32 %v733, %v803
  %v819 = vmul.f32 %v737, %v803
  %v820 = vmul.f32 %v741, %v803
  %v821 = vmul.f32 %v745, %v803
  %v822 = vmul.f32 %v749, %v803
  %v823 = vmul.f32 %v753, %v803
  %v824 = vmul.f32 %v757, %v803
  %v825 = vmul.f32 %v761, %v803
  %v826 = vmul.f32 %v765, %v803
  %v827 = vmul.f32 %v769, %v803
  %v828 = vmul.f32 %v773, %v803
  %v829 = vmul.f32 %v777, %v803
  %v830 = vmul.f32 %v781, %v803
  %v831 = vmul.f32 %v785, %v803
  %v832 = vmul.f32 %v789, %v803
  %v833 = vmul.f32 %v793, %v803
  %v834 = vmul.f32 %v797, %v803
  %v835 = vmul.f32 %v801, %v803
  %v836 = vadd.f32 %v643, %v804
  %v837 = vadd.f32 %v644, %v805
  %v838 = vadd.f32 %v645, %v806
  %v839 = vadd.f32 %v646, %v807
  %v840 = vadd.f32 %v647, %v808
  %v841 = vadd.f32 %v648, %v809
  %v842 = vadd.f32 %v649, %v810
  %v843 = vadd.f32 %v650, %v811
  %v844 = vadd.f32 %v651, %v812
  %v845 = vadd.f32 %v652, %v813
  %v846 = vadd.f32 %v653, %v814
  %v847 = vadd.f32 %v654, %v815
  %v848 = vadd.f32 %v655, %v816
  %v849 = vadd.f32 %v656, %v817
  %v850 = vadd.f32 %v657, %v818
  %v851 = vadd.f32 %v658, %v819
  %v852 = vadd.f32 %v659, %v820
  %v853 = vadd.f32 %v660, %v821
  %v854 = vadd.f32 %v661, %v822
  %v855 = vadd.f32 %v662, %v823
  %v856 = vadd.f32 %v663, %v824
  %v857 = vadd.f32 %v664, %v825
  %v858 = vadd.f32 %v665, %v826
  %v859 = vadd.f32 %v666, %v827
  %v860 = vadd.f32 %v667, %v828
  %v861 = vadd.f32 %v668, %v829
  %v862 = vadd.f32 %v669, %v830
  %v863 = vadd.f32 %v670, %v831
  %v864 = vadd.f32 %v671, %v832
  %v865 = vadd.f32 %v672, %v833
  %v866 = vadd.f32 %v673, %v834
  %v867 = vadd.f32 %v674, %v835
  %v868 = vtanh.pop %v836
  %v869 = vtanh.pop %v837
  %v870 = vtanh.pop %v838
  %v871 = vtanh.pop %v839
  %v872 = vtanh.pop %v840
  %v873 = vtanh.pop %v841
  %v874 = vtanh.pop %v842
  %v875 = vtanh.pop %v843
  %v876 = vtanh.pop %v844
  %v877 = vtanh.pop %v845
  %v878 = vtanh.pop %v846
  %v879 = vtanh.pop %v847
  %v880 = vtanh.pop %v848
  %v881 = vtanh.pop %v849
  %v882 = vtanh.pop %v850
  %v883 = vtanh.pop %v851
  %v884 = vtanh.pop %v852
  %v885 = vtanh.pop %v853
  %v886 = vtanh.pop %v854
  %v887 = vtanh.pop %v855
  %v888 = vtanh.pop %v856
  %v889 = vtanh.pop %v857
  %v890 = vtanh.pop %v858
  %v891 = vtanh.pop %v859
  %v892 = vtanh.pop %v860
  %v893 = vtanh.pop %v861
  %v894 = vtanh.pop %v862
  %v895 = vtanh.pop %v863
  %v896 = vtanh.pop %v864
  %v897 = vtanh.pop %v865
  %v898 = vtanh.pop %v866
  %v899 = vtanh.pop %v867
  %v900 = vpack.c.bf16 %v869, %v868
  %v901 = vpack.c.bf16 %v871, %v870
  %v902 = vpack.c.bf16 %v873, %v872
  %v903 = vpack.c.bf16 %v875, %v874
  %v904 = vpack.c.bf16 %v877, %v876
  %v905 = vpack.c.bf16 %v879, %v878
  %v906 = vpack.c.bf16 %v881, %v880
  %v907 = vpack.c.bf16 %v883, %v882
  %v908 = vpack.c.bf16 %v885, %v884
  %v909 = vpack.c.bf16 %v887, %v886
  %v910 = vpack.c.bf16 %v889, %v888
  %v911 = vpack.c.bf16 %v891, %v890
  %v912 = vpack.c.bf16 %v893, %v892
  %v913 = vpack.c.bf16 %v895, %v894
  %v914 = vpack.c.bf16 %v897, %v896
  %v915 = vpack.c.bf16 %v899, %v898
  %v916 = vld [vmem:[%s3] sm:$0xf]
  %v917 = vld [vmem:[%s3 + $0x4] sm:$0xf]
  %v918 = vld [vmem:[%s3 + $0x8] sm:$0xf]
  %v919 = vld [vmem:[%s3 + $0xc] sm:$0xf]
  %v920 = vld [vmem:[%s4] sm:$0x1]
  %v922 = vperm.slane %v920, 0
  %v928 = vunpack.c.l.b16 %v916
  %v929 = vunpack.c.l.b16 %v917
  %v930 = vunpack.c.l.b16 %v918
  %v931 = vunpack.c.l.b16 %v919
  %v932 = vpack.c.b16 %v929, %v928
  %v933 = vpack.c.b16 %v931, %v930
  %vm936 = vcmask 261120
  %v938 = vsel %vm936, %v900, 0
  %v941 = vsel %vm936, %v901, 0
  %v944 = vsel %vm936, %v902, 0
  %v947 = vsel %vm936, %v903, 0
  %v950 = vsel %vm936, %v904, 0
  %v953 = vsel %vm936, %v905, 0
  %v956 = vsel %vm936, %v906, 0
  %v959 = vsel %vm936, %v907, 0
  %v962 = vsel %vm936, %v908, 0
  %v965 = vsel %vm936, %v909, 0
  %v968 = vsel %vm936, %v910, 0
  %v971 = vsel %vm936, %v911, 0
  %v974 = vsel %vm936, %v912, 0
  %v977 = vsel %vm936, %v913, 0
  %v980 = vsel %vm936, %v914, 0
  %v983 = vsel %vm936, %v915, 0
  %985 = vmatpush.bf16.msra.mxu0 0
  %986 = vmatpush.bf16.msra.mxu0 0
  %987 = vmatpush.bf16.msra.mxu0 0
  %988 = vmatpush.bf16.msra.mxu0 0
  %989 = vmatpush.bf16.msra.mxu0 0
  %990 = vmatpush.bf16.msra.mxu0 0
  %991 = vmatpush.bf16.msra.mxu0 %v933
  %992 = vmatpush.bf16.msra.mxu0 %v932
  %993 = vmatmul.bf16.gmra.mxu0 %v938
  %v994 = vpop.f32.mrf.mxu0
  %v995 = vadd.f32 %v922, %v994
  %v996 = vpop.f32.mrf.mxu0
  %v997 = vadd.f32 %v922, %v996
  %998 = vmatmul.bf16.gmra.mxu0 %v941
  %v999 = vpop.f32.mrf.mxu0
  %v1000 = vadd.f32 %v922, %v999
  %v1001 = vpop.f32.mrf.mxu0
  %v1002 = vadd.f32 %v922, %v1001
  %1003 = vmatmul.bf16.gmra.mxu0 %v944
  %v1004 = vpop.f32.mrf.mxu0
  %v1005 = vadd.f32 %v922, %v1004
  %v1006 = vpop.f32.mrf.mxu0
  %v1007 = vadd.f32 %v922, %v1006
  %1008 = vmatmul.bf16.gmra.mxu0 %v947
  %v1009 = vpop.f32.mrf.mxu0
  %v1010 = vadd.f32 %v922, %v1009
  %v1011 = vpop.f32.mrf.mxu0
  %v1012 = vadd.f32 %v922, %v1011
  %1013 = vmatmul.bf16.gmra.mxu0 %v950
  %v1014 = vpop.f32.mrf.mxu0
  %v1015 = vadd.f32 %v922, %v1014
  %v1016 = vpop.f32.mrf.mxu0
  %v1017 = vadd.f32 %v922, %v1016
  %1018 = vmatmul.bf16.gmra.mxu0 %v953
  %v1019 = vpop.f32.mrf.mxu0
  %v1020 = vadd.f32 %v922, %v1019
  %v1021 = vpop.f32.mrf.mxu0
  %v1022 = vadd.f32 %v922, %v1021
  %1023 = vmatmul.bf16.gmra.mxu0 %v956
  %v1024 = vpop.f32.mrf.mxu0
  %v1025 = vadd.f32 %v922, %v1024
  %v1026 = vpop.f32.mrf.mxu0
  %v1027 = vadd.f32 %v922, %v1026
  %1028 = vmatmul.bf16.gmra.mxu0 %v959
  %v1029 = vpop.f32.mrf.mxu0
  %v1030 = vadd.f32 %v922, %v1029
  %v1031 = vpop.f32.mrf.mxu0
  %v1032 = vadd.f32 %v922, %v1031
  %1033 = vmatmul.bf16.gmra.mxu0 %v962
  %v1034 = vpop.f32.mrf.mxu0
  %v1035 = vadd.f32 %v922, %v1034
  %v1036 = vpop.f32.mrf.mxu0
  %v1037 = vadd.f32 %v922, %v1036
  %1038 = vmatmul.bf16.gmra.mxu0 %v965
  %v1039 = vpop.f32.mrf.mxu0
  %v1040 = vadd.f32 %v922, %v1039
  %v1041 = vpop.f32.mrf.mxu0
  %v1042 = vadd.f32 %v922, %v1041
  %1043 = vmatmul.bf16.gmra.mxu0 %v968
  %v1044 = vpop.f32.mrf.mxu0
  %v1045 = vadd.f32 %v922, %v1044
  %v1046 = vpop.f32.mrf.mxu0
  %v1047 = vadd.f32 %v922, %v1046
  %1048 = vmatmul.bf16.gmra.mxu0 %v971
  %v1049 = vpop.f32.mrf.mxu0
  %v1050 = vadd.f32 %v922, %v1049
  %v1051 = vpop.f32.mrf.mxu0
  %v1052 = vadd.f32 %v922, %v1051
  %1053 = vmatmul.bf16.gmra.mxu0 %v974
  %v1054 = vpop.f32.mrf.mxu0
  %v1055 = vadd.f32 %v922, %v1054
  %v1056 = vpop.f32.mrf.mxu0
  %v1057 = vadd.f32 %v922, %v1056
  %1058 = vmatmul.bf16.gmra.mxu0 %v977
  %v1059 = vpop.f32.mrf.mxu0
  %v1060 = vadd.f32 %v922, %v1059
  %v1061 = vpop.f32.mrf.mxu0
  %v1062 = vadd.f32 %v922, %v1061
  %1063 = vmatmul.bf16.gmra.mxu0 %v980
  %v1064 = vpop.f32.mrf.mxu0
  %v1065 = vadd.f32 %v922, %v1064
  %v1066 = vpop.f32.mrf.mxu0
  %v1067 = vadd.f32 %v922, %v1066
  %1068 = vmatmul.bf16.gmra.mxu0 %v983
  %v1069 = vpop.f32.mrf.mxu0
  %v1070 = vadd.f32 %v922, %v1069
  %v1071 = vpop.f32.mrf.mxu0
  %v1072 = vadd.f32 %v922, %v1071
  %1073 = vdwg.mxu0
  %v1074 = vtanh.pop %v995
  %v1075 = vtanh.pop %v997
  %v1076 = vtanh.pop %v1000
  %v1077 = vtanh.pop %v1002
  %v1078 = vtanh.pop %v1005
  %v1079 = vtanh.pop %v1007
  %v1080 = vtanh.pop %v1010
  %v1081 = vtanh.pop %v1012
  %v1082 = vtanh.pop %v1015
  %v1083 = vtanh.pop %v1017
  %v1084 = vtanh.pop %v1020
  %v1085 = vtanh.pop %v1022
  %v1086 = vtanh.pop %v1025
  %v1087 = vtanh.pop %v1027
  %v1088 = vtanh.pop %v1030
  %v1089 = vtanh.pop %v1032
  %v1090 = vtanh.pop %v1035
  %v1091 = vtanh.pop %v1037
  %v1092 = vtanh.pop %v1040
  %v1093 = vtanh.pop %v1042
  %v1094 = vtanh.pop %v1045
  %v1095 = vtanh.pop %v1047
  %v1096 = vtanh.pop %v1050
  %v1097 = vtanh.pop %v1052
  %v1098 = vtanh.pop %v1055
  %v1099 = vtanh.pop %v1057
  %v1100 = vtanh.pop %v1060
  %v1101 = vtanh.pop %v1062
  %v1102 = vtanh.pop %v1065
  %v1103 = vtanh.pop %v1067
  %v1104 = vtanh.pop %v1070
  %v1105 = vtanh.pop %v1072
  %v1106 = vpack.c.bf16 %v1075, %v1074
  %v1107 = vpack.c.bf16 %v1077, %v1076
  %v1108 = vpack.c.bf16 %v1079, %v1078
  %v1109 = vpack.c.bf16 %v1081, %v1080
  %v1110 = vpack.c.bf16 %v1083, %v1082
  %v1111 = vpack.c.bf16 %v1085, %v1084
  %v1112 = vpack.c.bf16 %v1087, %v1086
  %v1113 = vpack.c.bf16 %v1089, %v1088
  %v1114 = vpack.c.bf16 %v1091, %v1090
  %v1115 = vpack.c.bf16 %v1093, %v1092
  %v1116 = vpack.c.bf16 %v1095, %v1094
  %v1117 = vpack.c.bf16 %v1097, %v1096
  %v1118 = vpack.c.bf16 %v1099, %v1098
  %v1119 = vpack.c.bf16 %v1101, %v1100
  %v1120 = vpack.c.bf16 %v1103, %v1102
  %v1121 = vpack.c.bf16 %v1105, %v1104
  %s1122 = scalar_lea.vmem %s3, 16
  %v1123 = vld [vmem:[%s1122] sm:$0xf]
  %v1124 = vld [vmem:[%s1122 + $0x4] sm:$0xf]
  %v1125 = vld [vmem:[%s1122 + $0x8] sm:$0xf]
  %v1126 = vld [vmem:[%s1122 + $0xc] sm:$0xf]
  %s1127 = scalar_lea.vmem %s4, 1
  %v1128 = vld [vmem:[%s1127] sm:$0x1]
  %v1130 = vperm.slane %v1128, 0
  %v1136 = vunpack.c.l.b16 %v1123
  %v1137 = vunpack.c.l.b16 %v1124
  %v1138 = vunpack.c.l.b16 %v1125
  %v1139 = vunpack.c.l.b16 %v1126
  %v1140 = vpack.c.b16 %v1137, %v1136
  %v1141 = vpack.c.b16 %v1139, %v1138
  %v1145 = vsel %vm936, %v1106, 0
  %v1148 = vsel %vm936, %v1107, 0
  %v1151 = vsel %vm936, %v1108, 0
  %v1154 = vsel %vm936, %v1109, 0
  %v1157 = vsel %vm936, %v1110, 0
  %v1160 = vsel %vm936, %v1111, 0
  %v1163 = vsel %vm936, %v1112, 0
  %v1166 = vsel %vm936, %v1113, 0
  %v1169 = vsel %vm936, %v1114, 0
  %v1172 = vsel %vm936, %v1115, 0
  %v1175 = vsel %vm936, %v1116, 0
  %v1178 = vsel %vm936, %v1117, 0
  %v1181 = vsel %vm936, %v1118, 0
  %v1184 = vsel %vm936, %v1119, 0
  %v1187 = vsel %vm936, %v1120, 0
  %v1190 = vsel %vm936, %v1121, 0
  %1192 = vmatpush.bf16.msra.mxu0 0
  %1193 = vmatpush.bf16.msra.mxu0 0
  %1194 = vmatpush.bf16.msra.mxu0 0
  %1195 = vmatpush.bf16.msra.mxu0 0
  %1196 = vmatpush.bf16.msra.mxu0 0
  %1197 = vmatpush.bf16.msra.mxu0 0
  %1198 = vmatpush.bf16.msra.mxu0 %v1141
  %1199 = vmatpush.bf16.msra.mxu0 %v1140
  %1200 = vmatmul.bf16.gmra.mxu0 %v1145
  %v1201 = vpop.f32.mrf.mxu0
  %v1202 = vadd.f32 %v1130, %v1201
  %v1203 = vpop.f32.mrf.mxu0
  %v1204 = vadd.f32 %v1130, %v1203
  %1205 = vmatmul.bf16.gmra.mxu0 %v1148
  %v1206 = vpop.f32.mrf.mxu0
  %v1207 = vadd.f32 %v1130, %v1206
  %v1208 = vpop.f32.mrf.mxu0
  %v1209 = vadd.f32 %v1130, %v1208
  %1210 = vmatmul.bf16.gmra.mxu0 %v1151
  %v1211 = vpop.f32.mrf.mxu0
  %v1212 = vadd.f32 %v1130, %v1211
  %v1213 = vpop.f32.mrf.mxu0
  %v1214 = vadd.f32 %v1130, %v1213
  %1215 = vmatmul.bf16.gmra.mxu0 %v1154
  %v1216 = vpop.f32.mrf.mxu0
  %v1217 = vadd.f32 %v1130, %v1216
  %v1218 = vpop.f32.mrf.mxu0
  %v1219 = vadd.f32 %v1130, %v1218
  %1220 = vmatmul.bf16.gmra.mxu0 %v1157
  %v1221 = vpop.f32.mrf.mxu0
  %v1222 = vadd.f32 %v1130, %v1221
  %v1223 = vpop.f32.mrf.mxu0
  %v1224 = vadd.f32 %v1130, %v1223
  %1225 = vmatmul.bf16.gmra.mxu0 %v1160
  %v1226 = vpop.f32.mrf.mxu0
  %v1227 = vadd.f32 %v1130, %v1226
  %v1228 = vpop.f32.mrf.mxu0
  %v1229 = vadd.f32 %v1130, %v1228
  %1230 = vmatmul.bf16.gmra.mxu0 %v1163
  %v1231 = vpop.f32.mrf.mxu0
  %v1232 = vadd.f32 %v1130, %v1231
  %v1233 = vpop.f32.mrf.mxu0
  %v1234 = vadd.f32 %v1130, %v1233
  %1235 = vmatmul.bf16.gmra.mxu0 %v1166
  %v1236 = vpop.f32.mrf.mxu0
  %v1237 = vadd.f32 %v1130, %v1236
  %v1238 = vpop.f32.mrf.mxu0
  %v1239 = vadd.f32 %v1130, %v1238
  %1240 = vmatmul.bf16.gmra.mxu0 %v1169
  %v1241 = vpop.f32.mrf.mxu0
  %v1242 = vadd.f32 %v1130, %v1241
  %v1243 = vpop.f32.mrf.mxu0
  %v1244 = vadd.f32 %v1130, %v1243
  %1245 = vmatmul.bf16.gmra.mxu0 %v1172
  %v1246 = vpop.f32.mrf.mxu0
  %v1247 = vadd.f32 %v1130, %v1246
  %v1248 = vpop.f32.mrf.mxu0
  %v1249 = vadd.f32 %v1130, %v1248
  %1250 = vmatmul.bf16.gmra.mxu0 %v1175
  %v1251 = vpop.f32.mrf.mxu0
  %v1252 = vadd.f32 %v1130, %v1251
  %v1253 = vpop.f32.mrf.mxu0
  %v1254 = vadd.f32 %v1130, %v1253
  %1255 = vmatmul.bf16.gmra.mxu0 %v1178
  %v1256 = vpop.f32.mrf.mxu0
  %v1257 = vadd.f32 %v1130, %v1256
  %v1258 = vpop.f32.mrf.mxu0
  %v1259 = vadd.f32 %v1130, %v1258
  %1260 = vmatmul.bf16.gmra.mxu0 %v1181
  %v1261 = vpop.f32.mrf.mxu0
  %v1262 = vadd.f32 %v1130, %v1261
  %v1263 = vpop.f32.mrf.mxu0
  %v1264 = vadd.f32 %v1130, %v1263
  %1265 = vmatmul.bf16.gmra.mxu0 %v1184
  %v1266 = vpop.f32.mrf.mxu0
  %v1267 = vadd.f32 %v1130, %v1266
  %v1268 = vpop.f32.mrf.mxu0
  %v1269 = vadd.f32 %v1130, %v1268
  %1270 = vmatmul.bf16.gmra.mxu0 %v1187
  %v1271 = vpop.f32.mrf.mxu0
  %v1272 = vadd.f32 %v1130, %v1271
  %v1273 = vpop.f32.mrf.mxu0
  %v1274 = vadd.f32 %v1130, %v1273
  %1275 = vmatmul.bf16.gmra.mxu0 %v1190
  %v1276 = vpop.f32.mrf.mxu0
  %v1277 = vadd.f32 %v1130, %v1276
  %v1278 = vpop.f32.mrf.mxu0
  %v1279 = vadd.f32 %v1130, %v1278
  %1280 = vdwg.mxu0
  %v1281 = vtanh.pop %v1202
  %v1282 = vtanh.pop %v1204
  %v1283 = vtanh.pop %v1207
  %v1284 = vtanh.pop %v1209
  %v1285 = vtanh.pop %v1212
  %v1286 = vtanh.pop %v1214
  %v1287 = vtanh.pop %v1217
  %v1288 = vtanh.pop %v1219
  %v1289 = vtanh.pop %v1222
  %v1290 = vtanh.pop %v1224
  %v1291 = vtanh.pop %v1227
  %v1292 = vtanh.pop %v1229
  %v1293 = vtanh.pop %v1232
  %v1294 = vtanh.pop %v1234
  %v1295 = vtanh.pop %v1237
  %v1296 = vtanh.pop %v1239
  %v1297 = vtanh.pop %v1242
  %v1298 = vtanh.pop %v1244
  %v1299 = vtanh.pop %v1247
  %v1300 = vtanh.pop %v1249
  %v1301 = vtanh.pop %v1252
  %v1302 = vtanh.pop %v1254
  %v1303 = vtanh.pop %v1257
  %v1304 = vtanh.pop %v1259
  %v1305 = vtanh.pop %v1262
  %v1306 = vtanh.pop %v1264
  %v1307 = vtanh.pop %v1267
  %v1308 = vtanh.pop %v1269
  %v1309 = vtanh.pop %v1272
  %v1310 = vtanh.pop %v1274
  %v1311 = vtanh.pop %v1277
  %v1312 = vtanh.pop %v1279
  %v1313 = vpack.c.bf16 %v1282, %v1281
  %v1314 = vpack.c.bf16 %v1284, %v1283
  %v1315 = vpack.c.bf16 %v1286, %v1285
  %v1316 = vpack.c.bf16 %v1288, %v1287
  %v1317 = vpack.c.bf16 %v1290, %v1289
  %v1318 = vpack.c.bf16 %v1292, %v1291
  %v1319 = vpack.c.bf16 %v1294, %v1293
  %v1320 = vpack.c.bf16 %v1296, %v1295
  %v1321 = vpack.c.bf16 %v1298, %v1297
  %v1322 = vpack.c.bf16 %v1300, %v1299
  %v1323 = vpack.c.bf16 %v1302, %v1301
  %v1324 = vpack.c.bf16 %v1304, %v1303
  %v1325 = vpack.c.bf16 %v1306, %v1305
  %v1326 = vpack.c.bf16 %v1308, %v1307
  %v1327 = vpack.c.bf16 %v1310, %v1309
  %v1328 = vpack.c.bf16 %v1312, %v1311
  %v1329 = vld [vmem:[%s5] sm:$0xf]
  %v1330 = vld [vmem:[%s5 + $0x4] sm:$0xf]
  %v1331 = vld [vmem:[%s5 + $0x8] sm:$0xf]
  %v1332 = vld [vmem:[%s5 + $0xc] sm:$0xf]
  %v1333 = vld [vmem:[%s6] sm:$0x1]
  %v1335 = vperm.slane %v1333, 0
  %v1341 = vunpack.c.l.b16 %v1329
  %v1342 = vunpack.c.l.b16 %v1330
  %v1343 = vunpack.c.l.b16 %v1331
  %v1344 = vunpack.c.l.b16 %v1332
  %v1345 = vpack.c.b16 %v1342, %v1341
  %v1346 = vpack.c.b16 %v1344, %v1343
  %v1350 = vsel %vm936, %v1313, 0
  %v1353 = vsel %vm936, %v1314, 0
  %v1356 = vsel %vm936, %v1315, 0
  %v1359 = vsel %vm936, %v1316, 0
  %v1362 = vsel %vm936, %v1317, 0
  %v1365 = vsel %vm936, %v1318, 0
  %v1368 = vsel %vm936, %v1319, 0
  %v1371 = vsel %vm936, %v1320, 0
  %v1374 = vsel %vm936, %v1321, 0
  %v1377 = vsel %vm936, %v1322, 0
  %v1380 = vsel %vm936, %v1323, 0
  %v1383 = vsel %vm936, %v1324, 0
  %v1386 = vsel %vm936, %v1325, 0
  %v1389 = vsel %vm936, %v1326, 0
  %v1392 = vsel %vm936, %v1327, 0
  %v1395 = vsel %vm936, %v1328, 0
  %1397 = vmatpush.bf16.msra.mxu0 0
  %1398 = vmatpush.bf16.msra.mxu0 0
  %1399 = vmatpush.bf16.msra.mxu0 0
  %1400 = vmatpush.bf16.msra.mxu0 0
  %1401 = vmatpush.bf16.msra.mxu0 0
  %1402 = vmatpush.bf16.msra.mxu0 0
  %1403 = vmatpush.bf16.msra.mxu0 %v1346
  %1404 = vmatpush.bf16.msra.mxu0 %v1345
  %1405 = vmatmul.bf16.gmra.mxu0 %v1350
  %v1406 = vpop.f32.mrf.mxu0
  %v1407 = vadd.f32 %v1335, %v1406
  %v1408 = vpop.f32.mrf.mxu0
  %v1409 = vadd.f32 %v1335, %v1408
  %1410 = vmatmul.bf16.gmra.mxu0 %v1353
  %v1411 = vpop.f32.mrf.mxu0
  %v1412 = vadd.f32 %v1335, %v1411
  %v1413 = vpop.f32.mrf.mxu0
  %v1414 = vadd.f32 %v1335, %v1413
  %1415 = vmatmul.bf16.gmra.mxu0 %v1356
  %v1416 = vpop.f32.mrf.mxu0
  %v1417 = vadd.f32 %v1335, %v1416
  %v1418 = vpop.f32.mrf.mxu0
  %v1419 = vadd.f32 %v1335, %v1418
  %1420 = vmatmul.bf16.gmra.mxu0 %v1359
  %v1421 = vpop.f32.mrf.mxu0
  %v1422 = vadd.f32 %v1335, %v1421
  %v1423 = vpop.f32.mrf.mxu0
  %v1424 = vadd.f32 %v1335, %v1423
  %1425 = vmatmul.bf16.gmra.mxu0 %v1362
  %v1426 = vpop.f32.mrf.mxu0
  %v1427 = vadd.f32 %v1335, %v1426
  %v1428 = vpop.f32.mrf.mxu0
  %v1429 = vadd.f32 %v1335, %v1428
  %1430 = vmatmul.bf16.gmra.mxu0 %v1365
  %v1431 = vpop.f32.mrf.mxu0
  %v1432 = vadd.f32 %v1335, %v1431
  %v1433 = vpop.f32.mrf.mxu0
  %v1434 = vadd.f32 %v1335, %v1433
  %1435 = vmatmul.bf16.gmra.mxu0 %v1368
  %v1436 = vpop.f32.mrf.mxu0
  %v1437 = vadd.f32 %v1335, %v1436
  %v1438 = vpop.f32.mrf.mxu0
  %v1439 = vadd.f32 %v1335, %v1438
  %1440 = vmatmul.bf16.gmra.mxu0 %v1371
  %v1441 = vpop.f32.mrf.mxu0
  %v1442 = vadd.f32 %v1335, %v1441
  %v1443 = vpop.f32.mrf.mxu0
  %v1444 = vadd.f32 %v1335, %v1443
  %1445 = vmatmul.bf16.gmra.mxu0 %v1374
  %v1446 = vpop.f32.mrf.mxu0
  %v1447 = vadd.f32 %v1335, %v1446
  %v1448 = vpop.f32.mrf.mxu0
  %v1449 = vadd.f32 %v1335, %v1448
  %1450 = vmatmul.bf16.gmra.mxu0 %v1377
  %v1451 = vpop.f32.mrf.mxu0
  %v1452 = vadd.f32 %v1335, %v1451
  %v1453 = vpop.f32.mrf.mxu0
  %v1454 = vadd.f32 %v1335, %v1453
  %1455 = vmatmul.bf16.gmra.mxu0 %v1380
  %v1456 = vpop.f32.mrf.mxu0
  %v1457 = vadd.f32 %v1335, %v1456
  %v1458 = vpop.f32.mrf.mxu0
  %v1459 = vadd.f32 %v1335, %v1458
  %1460 = vmatmul.bf16.gmra.mxu0 %v1383
  %v1461 = vpop.f32.mrf.mxu0
  %v1462 = vadd.f32 %v1335, %v1461
  %v1463 = vpop.f32.mrf.mxu0
  %v1464 = vadd.f32 %v1335, %v1463
  %1465 = vmatmul.bf16.gmra.mxu0 %v1386
  %v1466 = vpop.f32.mrf.mxu0
  %v1467 = vadd.f32 %v1335, %v1466
  %v1468 = vpop.f32.mrf.mxu0
  %v1469 = vadd.f32 %v1335, %v1468
  %1470 = vmatmul.bf16.gmra.mxu0 %v1389
  %v1471 = vpop.f32.mrf.mxu0
  %v1472 = vadd.f32 %v1335, %v1471
  %v1473 = vpop.f32.mrf.mxu0
  %v1474 = vadd.f32 %v1335, %v1473
  %1475 = vmatmul.bf16.gmra.mxu0 %v1392
  %v1476 = vpop.f32.mrf.mxu0
  %v1477 = vadd.f32 %v1335, %v1476
  %v1478 = vpop.f32.mrf.mxu0
  %v1479 = vadd.f32 %v1335, %v1478
  %1480 = vmatmul.bf16.gmra.mxu0 %v1395
  %v1481 = vpop.f32.mrf.mxu0
  %v1482 = vadd.f32 %v1335, %v1481
  %v1483 = vpop.f32.mrf.mxu0
  %v1484 = vadd.f32 %v1335, %v1483
  %1485 = vdwg.mxu0
  %vm1486 = vcmask 15360
  %1487 = vst.msk [vmem:[%s7] sm:$0xff] %vm1486, %v1407
  %1488 = vst.msk [vmem:[%s7 + $0x8] sm:$0xff] %vm1486, %v1409
  %1489 = vst.msk [vmem:[%s7 + $0x10] sm:$0xff] %vm1486, %v1412
  %1490 = vst.msk [vmem:[%s7 + $0x18] sm:$0xff] %vm1486, %v1414
  %1491 = vst.msk [vmem:[%s7 + $0x20] sm:$0xff] %vm1486, %v1417
  %1492 = vst.msk [vmem:[%s7 + $0x28] sm:$0xff] %vm1486, %v1419
  %1493 = vst.msk [vmem:[%s7 + $0x30] sm:$0xff] %vm1486, %v1422
  %1494 = vst.msk [vmem:[%s7 + $0x38] sm:$0xff] %vm1486, %v1424
  %1495 = vst.msk [vmem:[%s7 + $0x40] sm:$0xff] %vm1486, %v1427
  %1496 = vst.msk [vmem:[%s7 + $0x48] sm:$0xff] %vm1486, %v1429
  %1497 = vst.msk [vmem:[%s7 + $0x50] sm:$0xff] %vm1486, %v1432
  %1498 = vst.msk [vmem:[%s7 + $0x58] sm:$0xff] %vm1486, %v1434
  %1499 = vst.msk [vmem:[%s7 + $0x60] sm:$0xff] %vm1486, %v1437
  %1500 = vst.msk [vmem:[%s7 + $0x68] sm:$0xff] %vm1486, %v1439
  %1501 = vst.msk [vmem:[%s7 + $0x70] sm:$0xff] %vm1486, %v1442
  %1502 = vst.msk [vmem:[%s7 + $0x78] sm:$0xff] %vm1486, %v1444
  %1503 = vst.msk [vmem:[%s7 + $0x80] sm:$0xff] %vm1486, %v1447
  %1504 = vst.msk [vmem:[%s7 + $0x88] sm:$0xff] %vm1486, %v1449
  %1505 = vst.msk [vmem:[%s7 + $0x90] sm:$0xff] %vm1486, %v1452
  %1506 = vst.msk [vmem:[%s7 + $0x98] sm:$0xff] %vm1486, %v1454
  %1507 = vst.msk [vmem:[%s7 + $0xa0] sm:$0xff] %vm1486, %v1457
  %1508 = vst.msk [vmem:[%s7 + $0xa8] sm:$0xff] %vm1486, %v1459
  %1509 = vst.msk [vmem:[%s7 + $0xb0] sm:$0xff] %vm1486, %v1462
  %1510 = vst.msk [vmem:[%s7 + $0xb8] sm:$0xff] %vm1486, %v1464
  %1511 = vst.msk [vmem:[%s7 + $0xc0] sm:$0xff] %vm1486, %v1467
  %1512 = vst.msk [vmem:[%s7 + $0xc8] sm:$0xff] %vm1486, %v1469
  %1513 = vst.msk [vmem:[%s7 + $0xd0] sm:$0xff] %vm1486, %v1472
  %1514 = vst.msk [vmem:[%s7 + $0xd8] sm:$0xff] %vm1486, %v1474
  %1515 = vst.msk [vmem:[%s7 + $0xe0] sm:$0xff] %vm1486, %v1477
  %1516 = vst.msk [vmem:[%s7 + $0xe8] sm:$0xff] %vm1486, %v1479
  %1517 = vst.msk [vmem:[%s7 + $0xf0] sm:$0xff] %vm1486, %v1482
  %1518 = vst.msk [vmem:[%s7 + $0xf8] sm:$0xff] %vm1486, %v1484
  // Predicated region
  $region30: #{fcn_forward.1} parent=0 // pred_check
    _
  $region31: #{fcn_forward.1} parent=0 // pred_check_branch
    %1520 = sbr.rel (0) target = $region33
  $region32: #{fcn_forward.1} parent=0 // pred_region
    _
  $region33: #{fcn_forward.1} parent=0 // pred_fallthru
    _
  // Predicated region
  $region34: #{fcn_forward.1} parent=0 // pred_check
    _
  $region35: #{fcn_forward.1} parent=0 // pred_check_branch
    %1522 = sbr.rel (0) target = $region37
  $region36: #{fcn_forward.1} parent=0 // pred_region
    _
  $region37: #{fcn_forward.1} parent=0 // pred_fallthru
    _

</llo_original>
